<compile_context>
chip_gen: v5e
topology: v5e:2x2
jax: 0.10.0
libtpu: 0.0.40
codegen_flags: <defaults>
</compile_context>

<pallas_src>
import functools

import jax
import jax.numpy as jnp
from jax.experimental import pallas as pl
from jax.experimental.pallas import tpu as pltpu


def _round_up(x, m):
    return ((x + m - 1) // m) * m


def _fused_mlp_kernel(x_ref, w_ref, o_ref, *, num_layers):
    """x_ref: [TM, P] activations, w_ref: [L, P, P] padded [in,out] weights."""
    h = x_ref[...]
    for l in range(num_layers):                       # static, unrolled layer loop
        # MXU matmul with f32 accumulation, exactly y = x @ W^T (W in [in,out]).
        h = jnp.dot(h, w_ref[l], preferred_element_type=jnp.float32)
        # leaky_relu(., 0.01) == max(y, 0.01*y): single VPU vmax.
        h = jnp.maximum(h, 0.01 * h)
    o_ref[...] = h.astype(o_ref.dtype)


def make_submlp_params(key, input_size, hidden_size, output_size, num_layers):
    """Deterministic parameter init. Weights are PyTorch-layout [out, in]."""
    dims = [input_size] + [hidden_size] * (num_layers - 1) + [output_size]
    weights = []
    for i in range(num_layers):
        key, sub = jax.random.split(key)
        fan_in, fan_out = dims[i], dims[i + 1]
        w = jax.random.normal(sub, (fan_out, fan_in), dtype=jnp.float32) * 0.1
        weights.append(w)
    return weights


def pack_weights(weights):
    """One-time prep: transpose to [in,out], zero-pad to [P,P] (P multiple of
    128 lanes) and stack into a single [L, P, P] f32 array."""
    max_dim = max(max(w.shape) for w in weights)
    P = _round_up(max_dim, 128)
    L = len(weights)
    packed = jnp.zeros((L, P, P), dtype=jnp.float32)
    for l, w in enumerate(weights):
        out_f, in_f = w.shape
        packed = packed.at[l, :in_f, :out_f].set(w.T)
    return packed


def submlp_forward(x, packed_w, output_size):
    """Fused forward: leaky_relu((...leaky_relu(x @ W0^T)...) @ W_{L-1}^T)."""
    M, in_f = x.shape
    L, P, _ = packed_w.shape

    # Pad batch to the sublane granule (8) and to the batch-tile size.
    M_pad = _round_up(M, 8)
    TM = min(M_pad, 256)
    M_pad = _round_up(M_pad, TM)

    x_pad = jnp.zeros((M_pad, P), dtype=jnp.float32).at[:M, :in_f].set(x)

    grid = (M_pad // TM,)
    flops = 2 * M_pad * P * P * L
    bytes_accessed = 4 * (M_pad * P + L * P * P + M_pad * P)

    out_pad = pl.pallas_call(
        functools.partial(_fused_mlp_kernel, num_layers=L),
        out_shape=jax.ShapeDtypeStruct((M_pad, P), jnp.float32),
        grid=grid,
        in_specs=[
            # Batch-tiled activations (lane-dense: P % 128 == 0, TM % 8 == 0).
            pl.BlockSpec((TM, P), lambda i: (i, 0)),
            # All layer weights resident in VMEM for every batch tile
            # (L*P*P*4B = 256 KiB here -> far below any scoped-VMEM limit).
            pl.BlockSpec((L, P, P), lambda i: (0, 0, 0)),
        ],
        out_specs=pl.BlockSpec((TM, P), lambda i: (i, 0)),  # lane-dense slab
        compiler_params=pltpu.CompilerParams(
            # Batch tiles are independent -> v7x splits them across its 2 TCs.
            dimension_semantics=("parallel",),
        ),
        cost_estimate=pl.CostEstimate(
            flops=flops, transcendentals=0, bytes_accessed=bytes_accessed),
    )(x_pad, packed_w)

    # Slice away batch/lane padding outside the kernel.
    return out_pad[:M, :output_size]


def submlp_forward_ref(x, weights):
    """Pure-JAX reference (PyTorch semantics) for correctness checking."""
    for w in weights:
        y = x @ w.T
        x = jnp.where(y >= 0, y, 0.01 * y)
    return x


if __name__ == "__main__":
    input_size, hidden_size, output_size, num_layers = 16, 32, 8, 4
    batch = 8

    key = jax.random.PRNGKey(0)
    key, xkey = jax.random.split(key)
    x = jax.random.normal(xkey, (batch, input_size), dtype=jnp.float32)

    weights = make_submlp_params(key, input_size, hidden_size, output_size,
                                 num_layers)
    packed_w = pack_weights(weights)          # one-time transpose / pad / stack

    out = submlp_forward(x, packed_w, output_size)
    out = jax.block_until_ready(out)

    ref = submlp_forward_ref(x, weights)
    assert out.shape == (batch, output_size)
    assert jnp.allclose(out, ref, atol=1e-5, rtol=1e-5)

    print("KERNEL_OK")
</pallas_src>

<mosaic_0001>
module attributes {stable_mosaic.version = 11 : i64} {
  func.func @_fused_mlp_kernel(%arg0: i32, %arg1: memref<8x128xf32, #tpu.memory_space<vmem>>, %arg2: memref<4x128x128xf32, #tpu.memory_space<vmem>>, %arg3: memref<8x128xf32, #tpu.memory_space<vmem>>) attributes {dimension_semantics = [#tpu.dimension_semantics<parallel>], iteration_bounds = array<i64: 1>, scalar_prefetch = 0 : i64, scratch_operands = 0 : i64, tpu.core_type = #tpu.core_type<tc>, window_params = [{transform_indices = @transform_0, window_bounds = array<i64: 8, 128>}, {pipeline_mode = #tpu.pipeline_mode<synchronous>, transform_indices = @transform_1, window_bounds = array<i64: 4, 128, 128>}, {transform_indices = @transform_2, window_bounds = array<i64: 8, 128>}]} {
    %c0 = arith.constant 0 : index
    %c0_0 = arith.constant 0 : index
    %0 = vector.load %arg1[%c0, %c0_0] : memref<8x128xf32, #tpu.memory_space<vmem>>, vector<8x128xf32>
    %c0_1 = arith.constant 0 : index
    %c0_2 = arith.constant 0 : index
    %c0_3 = arith.constant 0 : index
    %1 = vector.load %arg2[%c0_1, %c0_2, %c0_3] : memref<4x128x128xf32, #tpu.memory_space<vmem>>, vector<1x128x128xf32>
    %2 = vector.shape_cast %1 : vector<1x128x128xf32> to vector<128x128xf32>
    %cst = arith.constant dense<0.000000e+00> : vector<8x128xf32>
    %3 = tpu.matmul %0, %2, %cst {dimension_numbers = #tpu.dot_dimension_numbers<[1], [0], [0], [1], [0, 0, 1, 1], [], []>} : vector<8x128xf32>, vector<128x128xf32>, vector<8x128xf32> -> vector<8x128xf32>
    %cst_4 = arith.constant 0.00999999977 : f32
    %4 = vector.broadcast %cst_4 : f32 to vector<8x128xf32>
    %5 = arith.mulf %4, %3 : vector<8x128xf32>
    %6 = arith.maximumf %3, %5 : vector<8x128xf32>
    %c1 = arith.constant 1 : index
    %c0_5 = arith.constant 0 : index
    %c0_6 = arith.constant 0 : index
    %7 = vector.load %arg2[%c1, %c0_5, %c0_6] : memref<4x128x128xf32, #tpu.memory_space<vmem>>, vector<1x128x128xf32>
    %8 = vector.shape_cast %7 : vector<1x128x128xf32> to vector<128x128xf32>
    %cst_7 = arith.constant dense<0.000000e+00> : vector<8x128xf32>
    %9 = tpu.matmul %6, %8, %cst_7 {dimension_numbers = #tpu.dot_dimension_numbers<[1], [0], [0], [1], [0, 0, 1, 1], [], []>} : vector<8x128xf32>, vector<128x128xf32>, vector<8x128xf32> -> vector<8x128xf32>
    %cst_8 = arith.constant 0.00999999977 : f32
    %10 = vector.broadcast %cst_8 : f32 to vector<8x128xf32>
    %11 = arith.mulf %10, %9 : vector<8x128xf32>
    %12 = arith.maximumf %9, %11 : vector<8x128xf32>
    %c2 = arith.constant 2 : index
    %c0_9 = arith.constant 0 : index
    %c0_10 = arith.constant 0 : index
    %13 = vector.load %arg2[%c2, %c0_9, %c0_10] : memref<4x128x128xf32, #tpu.memory_space<vmem>>, vector<1x128x128xf32>
    %14 = vector.shape_cast %13 : vector<1x128x128xf32> to vector<128x128xf32>
    %cst_11 = arith.constant dense<0.000000e+00> : vector<8x128xf32>
    %15 = tpu.matmul %12, %14, %cst_11 {dimension_numbers = #tpu.dot_dimension_numbers<[1], [0], [0], [1], [0, 0, 1, 1], [], []>} : vector<8x128xf32>, vector<128x128xf32>, vector<8x128xf32> -> vector<8x128xf32>
    %cst_12 = arith.constant 0.00999999977 : f32
    %16 = vector.broadcast %cst_12 : f32 to vector<8x128xf32>
    %17 = arith.mulf %16, %15 : vector<8x128xf32>
    %18 = arith.maximumf %15, %17 : vector<8x128xf32>
    %c3 = arith.constant 3 : index
    %c0_13 = arith.constant 0 : index
    %c0_14 = arith.constant 0 : index
    %19 = vector.load %arg2[%c3, %c0_13, %c0_14] : memref<4x128x128xf32, #tpu.memory_space<vmem>>, vector<1x128x128xf32>
    %20 = vector.shape_cast %19 : vector<1x128x128xf32> to vector<128x128xf32>
    %cst_15 = arith.constant dense<0.000000e+00> : vector<8x128xf32>
    %21 = tpu.matmul %18, %20, %cst_15 {dimension_numbers = #tpu.dot_dimension_numbers<[1], [0], [0], [1], [0, 0, 1, 1], [], []>} : vector<8x128xf32>, vector<128x128xf32>, vector<8x128xf32> -> vector<8x128xf32>
    %cst_16 = arith.constant 0.00999999977 : f32
    %22 = vector.broadcast %cst_16 : f32 to vector<8x128xf32>
    %23 = arith.mulf %22, %21 : vector<8x128xf32>
    %24 = arith.maximumf %21, %23 : vector<8x128xf32>
    %c0_17 = arith.constant 0 : index
    %c0_18 = arith.constant 0 : index
    %25 = vector.load %arg3[%c0_17, %c0_18] : memref<8x128xf32, #tpu.memory_space<vmem>>, vector<8x128xf32>
    tpu.vector_store %arg3[%c0_17, %c0_18], %24 {strides = array<i32>} : memref<8x128xf32, #tpu.memory_space<vmem>>, vector<8x128xf32>,
    return
  }
  func.func @transform_0(%arg0: i32) -> (i32, i32) {
    %c0_i32 = arith.constant 0 : i32
    %c0_i32_0 = arith.constant 0 : i32
    return %arg0, %c0_i32 : i32, i32
  }
  func.func @transform_1(%arg0: i32) -> (i32, i32, i32) {
    %c0_i32 = arith.constant 0 : i32
    %c0_i32_0 = arith.constant 0 : i32
    %c0_i32_1 = arith.constant 0 : i32
    %c0_i32_2 = arith.constant 0 : i32
    return %c0_i32, %c0_i32_0, %c0_i32_1 : i32, i32, i32
  }
  func.func @transform_2(%arg0: i32) -> (i32, i32) {
    %c0_i32 = arith.constant 0 : i32
    %c0_i32_0 = arith.constant 0 : i32
    return %arg0, %c0_i32 : i32, i32
  }
}

</mosaic_0001>

<llo_original>
// kernel: tpu_custom_call.1
$region0: #{tpu_custom_call.1}
  #allocation0 [shape = 'u32[]', space=smem, size = 0x4, offset = 0x4, fixed_abs, tag = 'smem constant byte address 0x4 - core index']
  #allocation1 [shape = 'u32[72,128]{1,0:T(1,128)}', space=vmem, size = 0x9000, scoped, tag = 'internal scratch']
  %s0 = inlined_call_operand.hbm [shape: f32[8,128], index: 0, kind: input, shape index: {}]
  %s1 = inlined_call_operand.hbm [shape: f32[4,128,128], index: 1, kind: input, shape index: {}]
  %s2 = inlined_call_operand.hbm [shape: f32[8,128], index: 2, kind: output, shape index: {}]
  %s3 = sld [smem:[#allocation0]]
  $region26: #{tpu_custom_call.1} parent=0
    _
  %s5 = ssub.s32 1, %s3
  %s6 = scalar_select 0, %s5, %s3
  $region1: #{tpu_custom_call.1} parent=0
    #allocation2 [shape = 'u8[4096]{0}', space=vmem, size = 0x1000, scoped, tag = 'input window, operand 0, single buffered']
    #allocation3 [shape = 's32[1]{0}', space=sflag, size = 0x4, scoped, tag = 'scoped memory for tpu_custom_call.1']
    #allocation4 [shape = 's32[1]{0}', space=sflag, size = 0x4, scoped, tag = 'scoped memory for tpu_custom_call.1']
    #allocation5 [shape = 'u8[262144]{0}', space=vmem, size = 0x40000, scoped, tag = 'input window, operand 1, single buffered']
    #allocation6 [shape = 's32[1]{0}', space=sflag, size = 0x4, scoped, tag = 'scoped memory for tpu_custom_call.1']
    #allocation7 [shape = 'u8[4096]{0}', space=vmem, size = 0x1000, scoped, tag = 'output window, operand 0, single buffered']
    %7 = vsyncpa [#allocation3], 0
    %8 = vsyncpa [#allocation6], 0
    %9 = vsyncpa [#allocation4], 0
    // Predicated region
    $region2: #{tpu_custom_call.1} parent=1 // pred_check
      _
    $region3: #{tpu_custom_call.1} parent=1 // pred_check_branch
      %11 = sbr.rel (0) target = $region5
    $region4: #{tpu_custom_call.1} parent=1 // pred_region
      %13 = vsyncadd [#allocation3], 0
      %s15 = sshll.u32 %s0, 4
      %s16 = int_to_ptr.hbm [resolvable:$true] %s15
      %s17 = sshll.u32 [#allocation2], 4
      %s18 = int_to_ptr.vmem [resolvable:$true] %s17
      %20 = dma.hbm_to_vmem [thread:$0]  %s16, 128, %s18, [#allocation3]
    $region5: #{tpu_custom_call.1} parent=1 // pred_fallthru
      _
    // Predicated region
    $region6: #{tpu_custom_call.1} parent=1 // pred_check
      _
    $region7: #{tpu_custom_call.1} parent=1 // pred_check_branch
      %22 = sbr.rel (0) target = $region9
    $region8: #{tpu_custom_call.1} parent=1 // pred_region
      %24 = vsyncadd [#allocation6], 0
      %s25 = sshll.u32 %s1, 4
      %s26 = int_to_ptr.hbm [resolvable:$true] %s25
      %s27 = sshll.u32 [#allocation5], 4
      %s28 = int_to_ptr.vmem [resolvable:$true] %s27
      %33 = dma.hbm_to_vmem [thread:$0]  %s26, 8192, %s28, [#allocation6], 128, 128, 8
    $region9: #{tpu_custom_call.1} parent=1 // pred_fallthru
      _
    // Predicated region
    $region10: #{tpu_custom_call.1} parent=1 // pred_check
      _
    $region11: #{tpu_custom_call.1} parent=1 // pred_check_branch
      %35 = sbr.rel (0) target = $region13
    $region12: #{tpu_custom_call.1} parent=1 // pred_region
      %37 = dma.done [#allocation3], 128
    $region13: #{tpu_custom_call.1} parent=1 // pred_fallthru
      _
    // Predicated region
    $region14: #{tpu_custom_call.1} parent=1 // pred_check
      _
    $region15: #{tpu_custom_call.1} parent=1 // pred_check_branch
      %39 = sbr.rel (0) target = $region17
    $region16: #{tpu_custom_call.1} parent=1 // pred_region
      %41 = dma.done [#allocation6], 8192
    $region17: #{tpu_custom_call.1} parent=1 // pred_fallthru
      _
    %v42 = vld [vmem:[#allocation2] sm:$0xff]
    %v43 = vld [vmem:[#allocation5] sm:$0xff]
    %v44 = vld [vmem:[#allocation5 + $0x8] sm:$0xff]
    %v45 = vld [vmem:[#allocation5 + $0x10] sm:$0xff]
    %v46 = vld [vmem:[#allocation5 + $0x18] sm:$0xff]
    %v47 = vld [vmem:[#allocation5 + $0x20] sm:$0xff]
    %v48 = vld [vmem:[#allocation5 + $0x28] sm:$0xff]
    %v49 = vld [vmem:[#allocation5 + $0x30] sm:$0xff]
    %v50 = vld [vmem:[#allocation5 + $0x38] sm:$0xff]
    %v51 = vld [vmem:[#allocation5 + $0x40] sm:$0xff]
    %v52 = vld [vmem:[#allocation5 + $0x48] sm:$0xff]
    %v53 = vld [vmem:[#allocation5 + $0x50] sm:$0xff]
    %v54 = vld [vmem:[#allocation5 + $0x58] sm:$0xff]
    %v55 = vld [vmem:[#allocation5 + $0x60] sm:$0xff]
    %v56 = vld [vmem:[#allocation5 + $0x68] sm:$0xff]
    %v57 = vld [vmem:[#allocation5 + $0x70] sm:$0xff]
    %v58 = vld [vmem:[#allocation5 + $0x78] sm:$0xff]
    %59 = vmatpush.msra.mxu0 %v58
    %60 = vmatpush.msra.mxu0 %v57
    %61 = vmatpush.msra.mxu0 %v56
    %62 = vmatpush.msra.mxu0 %v55
    %63 = vmatpush.msra.mxu0 %v54
    %64 = vmatpush.msra.mxu0 %v53
    %65 = vmatpush.msra.mxu0 %v52
    %66 = vmatpush.msra.mxu0 %v51
    %67 = vmatpush.msra.mxu0 %v50
    %68 = vmatpush.msra.mxu0 %v49
    %69 = vmatpush.msra.mxu0 %v48
    %70 = vmatpush.msra.mxu0 %v47
    %71 = vmatpush.msra.mxu0 %v46
    %72 = vmatpush.msra.mxu0 %v45
    %73 = vmatpush.msra.mxu0 %v44
    %74 = vmatpush.msra.mxu0 %v43
    %75 = vmatmul.f32.gmra.mxu0 %v42
    %v76 = vpop.f32.mrf.mxu0
    %v77 = vadd.f32 0.0, %v76
    %78 = vdwg.mxu0
    %v79 = vmul.f32 %v77, 0.01
    %v80 = vmax.f32 %v77, %v79
    %s81 = scalar_lea.vmem [#allocation5], 128
    %v82 = vld [vmem:[%s81] sm:$0xff]
    %v83 = vld [vmem:[%s81 + $0x8] sm:$0xff]
    %v84 = vld [vmem:[%s81 + $0x10] sm:$0xff]
    %v85 = vld [vmem:[%s81 + $0x18] sm:$0xff]
    %v86 = vld [vmem:[%s81 + $0x20] sm:$0xff]
    %v87 = vld [vmem:[%s81 + $0x28] sm:$0xff]
    %v88 = vld [vmem:[%s81 + $0x30] sm:$0xff]
    %v89 = vld [vmem:[%s81 + $0x38] sm:$0xff]
    %v90 = vld [vmem:[%s81 + $0x40] sm:$0xff]
    %v91 = vld [vmem:[%s81 + $0x48] sm:$0xff]
    %v92 = vld [vmem:[%s81 + $0x50] sm:$0xff]
    %v93 = vld [vmem:[%s81 + $0x58] sm:$0xff]
    %v94 = vld [vmem:[%s81 + $0x60] sm:$0xff]
    %v95 = vld [vmem:[%s81 + $0x68] sm:$0xff]
    %v96 = vld [vmem:[%s81 + $0x70] sm:$0xff]
    %v97 = vld [vmem:[%s81 + $0x78] sm:$0xff]
    %98 = vmatpush.msra.mxu0 %v97
    %99 = vmatpush.msra.mxu0 %v96
    %100 = vmatpush.msra.mxu0 %v95
    %101 = vmatpush.msra.mxu0 %v94
    %102 = vmatpush.msra.mxu0 %v93
    %103 = vmatpush.msra.mxu0 %v92
    %104 = vmatpush.msra.mxu0 %v91
    %105 = vmatpush.msra.mxu0 %v90
    %106 = vmatpush.msra.mxu0 %v89
    %107 = vmatpush.msra.mxu0 %v88
    %108 = vmatpush.msra.mxu0 %v87
    %109 = vmatpush.msra.mxu0 %v86
    %110 = vmatpush.msra.mxu0 %v85
    %111 = vmatpush.msra.mxu0 %v84
    %112 = vmatpush.msra.mxu0 %v83
    %113 = vmatpush.msra.mxu0 %v82
    %114 = vmatmul.f32.gmra.mxu0 %v80
    %v115 = vpop.f32.mrf.mxu0
    %v116 = vadd.f32 0.0, %v115
    %117 = vdwg.mxu0
    %v118 = vmul.f32 %v116, 0.01
    %v119 = vmax.f32 %v116, %v118
    %s120 = scalar_lea.vmem [#allocation5], 256
    %v121 = vld [vmem:[%s120] sm:$0xff]
    %v122 = vld [vmem:[%s120 + $0x8] sm:$0xff]
    %v123 = vld [vmem:[%s120 + $0x10] sm:$0xff]
    %v124 = vld [vmem:[%s120 + $0x18] sm:$0xff]
    %v125 = vld [vmem:[%s120 + $0x20] sm:$0xff]
    %v126 = vld [vmem:[%s120 + $0x28] sm:$0xff]
    %v127 = vld [vmem:[%s120 + $0x30] sm:$0xff]
    %v128 = vld [vmem:[%s120 + $0x38] sm:$0xff]
    %v129 = vld [vmem:[%s120 + $0x40] sm:$0xff]
    %v130 = vld [vmem:[%s120 + $0x48] sm:$0xff]
    %v131 = vld [vmem:[%s120 + $0x50] sm:$0xff]
    %v132 = vld [vmem:[%s120 + $0x58] sm:$0xff]
    %v133 = vld [vmem:[%s120 + $0x60] sm:$0xff]
    %v134 = vld [vmem:[%s120 + $0x68] sm:$0xff]
    %v135 = vld [vmem:[%s120 + $0x70] sm:$0xff]
    %v136 = vld [vmem:[%s120 + $0x78] sm:$0xff]
    %137 = vmatpush.msra.mxu0 %v136
    %138 = vmatpush.msra.mxu0 %v135
    %139 = vmatpush.msra.mxu0 %v134
    %140 = vmatpush.msra.mxu0 %v133
    %141 = vmatpush.msra.mxu0 %v132
    %142 = vmatpush.msra.mxu0 %v131
    %143 = vmatpush.msra.mxu0 %v130
    %144 = vmatpush.msra.mxu0 %v129
    %145 = vmatpush.msra.mxu0 %v128
    %146 = vmatpush.msra.mxu0 %v127
    %147 = vmatpush.msra.mxu0 %v126
    %148 = vmatpush.msra.mxu0 %v125
    %149 = vmatpush.msra.mxu0 %v124
    %150 = vmatpush.msra.mxu0 %v123
    %151 = vmatpush.msra.mxu0 %v122
    %152 = vmatpush.msra.mxu0 %v121
    %153 = vmatmul.f32.gmra.mxu0 %v119
    %v154 = vpop.f32.mrf.mxu0
    %v155 = vadd.f32 0.0, %v154
    %156 = vdwg.mxu0
    %v157 = vmul.f32 %v155, 0.01
    %v158 = vmax.f32 %v155, %v157
    %s159 = scalar_lea.vmem [#allocation5], 384
    %v160 = vld [vmem:[%s159] sm:$0xff]
    %v161 = vld [vmem:[%s159 + $0x8] sm:$0xff]
    %v162 = vld [vmem:[%s159 + $0x10] sm:$0xff]
    %v163 = vld [vmem:[%s159 + $0x18] sm:$0xff]
    %v164 = vld [vmem:[%s159 + $0x20] sm:$0xff]
    %v165 = vld [vmem:[%s159 + $0x28] sm:$0xff]
    %v166 = vld [vmem:[%s159 + $0x30] sm:$0xff]
    %v167 = vld [vmem:[%s159 + $0x38] sm:$0xff]
    %v168 = vld [vmem:[%s159 + $0x40] sm:$0xff]
    %v169 = vld [vmem:[%s159 + $0x48] sm:$0xff]
    %v170 = vld [vmem:[%s159 + $0x50] sm:$0xff]
    %v171 = vld [vmem:[%s159 + $0x58] sm:$0xff]
    %v172 = vld [vmem:[%s159 + $0x60] sm:$0xff]
    %v173 = vld [vmem:[%s159 + $0x68] sm:$0xff]
    %v174 = vld [vmem:[%s159 + $0x70] sm:$0xff]
    %v175 = vld [vmem:[%s159 + $0x78] sm:$0xff]
    %176 = vmatpush.msra.mxu0 %v175
    %177 = vmatpush.msra.mxu0 %v174
    %178 = vmatpush.msra.mxu0 %v173
    %179 = vmatpush.msra.mxu0 %v172
    %180 = vmatpush.msra.mxu0 %v171
    %181 = vmatpush.msra.mxu0 %v170
    %182 = vmatpush.msra.mxu0 %v169
    %183 = vmatpush.msra.mxu0 %v168
    %184 = vmatpush.msra.mxu0 %v167
    %185 = vmatpush.msra.mxu0 %v166
    %186 = vmatpush.msra.mxu0 %v165
    %187 = vmatpush.msra.mxu0 %v164
    %188 = vmatpush.msra.mxu0 %v163
    %189 = vmatpush.msra.mxu0 %v162
    %190 = vmatpush.msra.mxu0 %v161
    %191 = vmatpush.msra.mxu0 %v160
    %192 = vmatmul.f32.gmra.mxu0 %v158
    %v193 = vpop.f32.mrf.mxu0
    %v194 = vadd.f32 0.0, %v193
    %195 = vdwg.mxu0
    %v196 = vmul.f32 %v194, 0.01
    %v197 = vmax.f32 %v194, %v196
    %198 = vst [vmem:[#allocation7] sm:$0xff] %v197
    // Predicated region
    $region18: #{tpu_custom_call.1} parent=1 // pred_check
      _
    $region19: #{tpu_custom_call.1} parent=1 // pred_check_branch
      %200 = sbr.rel (0) target = $region21
    $region20: #{tpu_custom_call.1} parent=1 // pred_region
      %202 = vsyncadd [#allocation4], 0
      %s204 = sshll.u32 [#allocation7], 4
      %s205 = int_to_ptr.vmem [resolvable:$true] %s204
      %s206 = sshll.u32 %s2, 4
      %s207 = int_to_ptr.hbm [resolvable:$true] %s206
      %209 = dma.vmem_to_hbm [thread:$0]  %s205, 128, %s207, [#allocation4]
    $region21: #{tpu_custom_call.1} parent=1 // pred_fallthru
      _
    // Predicated region
    $region22: #{tpu_custom_call.1} parent=1 // pred_check
      _
    $region23: #{tpu_custom_call.1} parent=1 // pred_check_branch
      %211 = sbr.rel (0) target = $region25
    $region24: #{tpu_custom_call.1} parent=1 // pred_region
      %213 = dma.done [#allocation4], 128
    $region25: #{tpu_custom_call.1} parent=1 // pred_fallthru
      _
    %214 = vsyncpa [#allocation3], 1
    %215 = vsyncpa [#allocation6], 1
    %216 = vsyncpa [#allocation4], 1

</llo_original>
